<compile_context>
chip_gen: v7x
topology: tpu7x:2x2x1
jax: 0.10.0
libtpu: 0.0.40
codegen_flags: <defaults>
</compile_context>

<pallas_src>
import functools

import jax
import jax.numpy as jnp
from jax import lax
from jax.experimental import pallas as pl
from jax.experimental.pallas import tpu as pltpu


def _positional_encoding(batch_positions, d_model, n_head, T_period):
    """Sinusoidal table of LTAE's PositionalEncoder, repeated n_head times: (B, T, d_model)."""
    d_pe = d_model // n_head
    idx = jnp.arange(d_pe)
    denom = jnp.power(jnp.float32(T_period), 2.0 * (idx // 2).astype(jnp.float32) / d_pe)
    tab = batch_positions.astype(jnp.float32)[:, :, None] / denom[None, None, :]
    pe_small = jnp.where((idx % 2 == 0)[None, None, :], jnp.sin(tab), jnp.cos(tab))
    return jnp.concatenate([pe_small] * n_head, axis=-1)


def _ltae_attn_kernel(x_ref, bias_ref, ind_ref, exp_ref, wbig_ref, out_ref,
                      *, n_head, seq_len, eps):
    # x block: (1, T*C, bn) -- pixels are the lane dimension.
    x = x_ref[0]                                   # (T*C, bn) f32
    tc, bn = x.shape
    g = n_head
    inv_cnt = 1.0 / float(tc // g)                 # 1 / (T * channels_per_group)

    # --- GroupNorm statistics: one matmul on [x ; x*x] with a block-diagonal indicator ---
    xcat = jnp.concatenate([x, x * x], axis=0)                                    # (2*T*C, bn)
    stats = jnp.dot(ind_ref[...], xcat, preferred_element_type=jnp.float32)       # (2G, bn)
    mean = stats[:g] * inv_cnt                                                    # (G, bn)
    ex2 = stats[g:] * inv_cnt
    var = jnp.maximum(ex2 - mean * mean, 0.0)      # clamp vs. E[x^2]-E[x]^2 cancellation
    rstd = lax.rsqrt(var + eps)

    # Broadcast per-group stats back to the (t, c) rows via tiny one-hot matmuls.
    mean_rows = jnp.dot(exp_ref[...], mean, preferred_element_type=jnp.float32)   # (T*C, bn)
    rstd_rows = jnp.dot(exp_ref[...], rstd, preferred_element_type=jnp.float32)   # (T*C, bn)
    xhat = (x - mean_rows) * rstd_rows

    # --- fused gamma/inconv/fc1_k/Q/head-select/temperature weight + per-(b,t,h) bias ---
    scores = jnp.dot(wbig_ref[...], xhat, preferred_element_type=jnp.float32)     # (H*T, bn)
    scores = scores + bias_ref[0]                                                 # bias: (H*T, 1)

    # --- softmax over the temporal axis (rows are ordered h*T + t) ---
    s = scores.reshape(n_head, seq_len, bn)
    m = jnp.max(s, axis=1, keepdims=True)
    p = jnp.exp(s - m)
    attn = p / jnp.sum(p, axis=1, keepdims=True)
    out_ref[0] = attn.reshape(n_head * seq_len, bn).astype(out_ref.dtype)


def ltae2dtiny_attention(x, batch_positions, params, *, n_head, d_k, d_model,
                         T_period=1000, block_n=None, eps=1e-5):
    """x: (B, T, C, H, W) float32; batch_positions: (B, T).
    Returns attention weights of shape (n_head, B, T, H, W) (PyTorch layout)."""
    B, T, C, H, W = x.shape
    hw = H * W
    assert C % n_head == 0 and d_model % n_head == 0
    if block_n is None:
        block_n = hw
        for cand in (2048, 1024, 512, 256, 128):   # lane-dense, VMEM-safe default
            if hw % cand == 0:
                block_n = cand
                break
    assert hw % block_n == 0
    gsz = C // n_head
    hi = lax.Precision.HIGHEST

    # ---- glue: free relayout, pixels become the lane dimension ----
    x_r = x.reshape(B, T * C, hw).astype(jnp.float32)

    # ---- glue: fold the whole post-GroupNorm affine chain into one weight + bias ----
    temperature = float(d_k) ** 0.5
    sel = (jnp.arange(n_head * d_k)[:, None] // d_k
           == jnp.arange(n_head)[None, :]).astype(jnp.float32)                   # (H*dk, H)
    qf = params['Q'].reshape(n_head * d_k).astype(jnp.float32)
    wk = params['fc1k_weight'].astype(jnp.float32)                               # (H*dk, dm)
    bk = params['fc1k_bias'].astype(jnp.float32)
    wq = jnp.dot(wk.T * qf[None, :], sel, precision=hi) / temperature            # (dm, H)
    bias_q = jnp.dot(bk * qf, sel, precision=hi) / temperature                   # (H,)

    wc = params['conv_weight'].reshape(d_model, C).astype(jnp.float32)
    bc = params['conv_bias'].astype(jnp.float32)
    wcf = jnp.dot(wc.T, wq, precision=hi)                                        # (C, H)

    gamma = params['gn_weight'].astype(jnp.float32)
    beta = params['gn_bias'].astype(jnp.float32)
    w_g = gamma[:, None] * wcf                                                   # (C, H)
    bias_const = (jnp.dot(beta, wcf, precision=hi)
                  + jnp.dot(bc, wq, precision=hi) + bias_q)                      # (H,)

    pe = _positional_encoding(batch_positions, d_model, n_head, T_period)        # (B, T, dm)
    bias_bth = jnp.einsum('btd,dh->bth', pe, wq, precision=hi) + bias_const      # (B, T, H)
    bias_rows = jnp.transpose(bias_bth, (0, 2, 1)).reshape(B, n_head * T, 1)     # rows = h*T+t

    # Fused weight, block-diagonal in time: (H*T, T*C).
    wbig = (w_g.T[:, None, None, :]
            * jnp.eye(T, dtype=jnp.float32)[None, :, :, None]).reshape(n_head * T, T * C)

    # GroupNorm indicator matrices (rows of x_r are ordered t*C + c).
    grp_of_row = (jnp.arange(T * C) % C) // gsz
    ind_g = (grp_of_row[None, :] == jnp.arange(n_head)[:, None]).astype(jnp.float32)  # (G, T*C)
    zeros = jnp.zeros_like(ind_g)
    ind2 = jnp.concatenate(
        [jnp.concatenate([ind_g, zeros], axis=1),
         jnp.concatenate([zeros, ind_g], axis=1)], axis=0)                       # (2G, 2*T*C)
    exp_g = ind_g.T                                                              # (T*C, G)

    kernel = functools.partial(_ltae_attn_kernel, n_head=n_head, seq_len=T, eps=eps)
    full2 = lambda b, p: (0, 0)

    n_pix = B * hw
    cost = pl.CostEstimate(
        flops=int(2 * n_pix * (2 * n_head * 2 * T * C + 2 * T * C * n_head
                               + n_head * T * T * C) + 6 * n_pix * T * C),
        transcendentals=int(n_pix * (n_head * T + n_head)),
        bytes_accessed=int(4 * (B * T * C * hw + B * n_head * T * hw + B * n_head * T)))

    out = pl.pallas_call(
        kernel,
        out_shape=jax.ShapeDtypeStruct((B, n_head * T, hw), jnp.float32),
        grid_spec=pltpu.PrefetchScalarGridSpec(
            num_scalar_prefetch=0,
            grid=(B, hw // block_n),
            in_specs=[
                pl.BlockSpec((1, T * C, block_n), lambda b, p: (b, 0, p)),       # x (lane-dense)
                pl.BlockSpec((1, n_head * T, 1), lambda b, p: (b, 0, 0)),        # fused bias
                pl.BlockSpec((2 * n_head, 2 * T * C), full2),                    # GN indicator
                pl.BlockSpec((T * C, n_head), full2),                            # group expand
                pl.BlockSpec((n_head * T, T * C), full2),                        # fused weight
            ],
            out_specs=pl.BlockSpec((1, n_head * T, block_n), lambda b, p: (b, 0, p)),
        ),
        compiler_params=pltpu.CompilerParams(
            dimension_semantics=("parallel", "parallel")),
        cost_estimate=cost,
    )(x_r, bias_rows, ind2, exp_g, wbig)

    # (B, H*T, hw) -> (n_head, B, T, H, W): leading-axis permute only (H, W stay minor).
    return jnp.transpose(out.reshape(B, n_head, T, H, W), (1, 0, 2, 3, 4))


def _reference_attention(x, batch_positions, params, *, n_head, d_k, d_model, T_period=1000):
    """Pure-JAX reference in the original op order (GroupNorm -> conv -> +PE -> fc1_k ->
    Q.K/temperature -> softmax over time). Used only for the self-test."""
    hi = lax.Precision.HIGHEST
    B, T, C, H, W = x.shape
    hw = H * W
    xr = jnp.transpose(x, (0, 3, 4, 1, 2)).reshape(B * hw, T, C).astype(jnp.float32)
    G, gsz = n_head, C // n_head
    xg = xr.reshape(B * hw, T, G, gsz)
    mean = jnp.mean(xg, axis=(1, 3), keepdims=True)
    var = jnp.mean((xg - mean) ** 2, axis=(1, 3), keepdims=True)
    xn = ((xg - mean) / jnp.sqrt(var + 1e-5)).reshape(B * hw, T, C)
    xn = xn * params['gn_weight'][None, None, :] + params['gn_bias'][None, None, :]
    wc = params['conv_weight'].reshape(d_model, C)
    y = jnp.einsum('ntc,dc->ntd', xn, wc, precision=hi) + params['conv_bias']
    pe = _positional_encoding(batch_positions, d_model, n_head, T_period)
    y = y + jnp.repeat(pe, hw, axis=0)
    k = jnp.einsum('ntd,jd->ntj', y, params['fc1k_weight'], precision=hi) + params['fc1k_bias']
    k = k.reshape(B * hw, T, n_head, d_k)
    scores = jnp.einsum('nthj,hj->nth', k, params['Q'], precision=hi) / (float(d_k) ** 0.5)
    attn = jax.nn.softmax(scores, axis=1)
    return jnp.transpose(attn.reshape(B, H, W, T, n_head), (4, 0, 3, 1, 2))


if __name__ == "__main__":
    key = jax.random.PRNGKey(0)
    B, T, C, H, W = 2, 8, 16, 16, 16
    n_head, d_k, d_model = 4, 4, 32

    ks = jax.random.split(key, 8)
    x = jax.random.normal(ks[0], (B, T, C, H, W), dtype=jnp.float32)
    batch_positions = (jnp.tile(jnp.arange(T, dtype=jnp.float32)[None] * 30.0, (B, 1))
                       + jnp.arange(B, dtype=jnp.float32)[:, None])

    params = {
        'gn_weight': 1.0 + 0.1 * jax.random.normal(ks[6], (C,), jnp.float32),
        'gn_bias': 0.1 * jax.random.normal(ks[7], (C,), jnp.float32),
        'conv_weight': jax.random.normal(ks[1], (d_model, C, 1), jnp.float32)
                       * (1.0 / jnp.sqrt(jnp.float32(C))),
        'conv_bias': jax.random.normal(ks[2], (d_model,), jnp.float32) * 0.01,
        'fc1k_weight': jax.random.normal(ks[3], (n_head * d_k, d_model), jnp.float32)
                       * jnp.sqrt(jnp.float32(2.0 / d_k)),
        'fc1k_bias': jax.random.normal(ks[4], (n_head * d_k,), jnp.float32) * 0.01,
        'Q': jax.random.normal(ks[5], (n_head, d_k), jnp.float32)
             * jnp.sqrt(jnp.float32(2.0 / d_k)),
    }

    attn = ltae2dtiny_attention(x, batch_positions, params,
                                n_head=n_head, d_k=d_k, d_model=d_model,
                                T_period=1000, block_n=128)
    attn = jax.block_until_ready(attn)

    assert attn.shape == (n_head, B, T, H, W)
    # attention weights over the temporal axis must sum to 1
    assert bool(jnp.allclose(jnp.sum(attn, axis=2), 1.0, atol=1e-4))

    ref = _reference_attention(x, batch_positions, params,
                               n_head=n_head, d_k=d_k, d_model=d_model, T_period=1000)
    err = float(jnp.max(jnp.abs(attn - ref)))
    assert err < 2e-2, f"max |attn - ref| = {err}"
    print("KERNEL_OK")
</pallas_src>

<mosaic_0001>
module attributes {stable_mosaic.version = 11 : i64} {
  func.func @_ltae_attn_kernel(%arg0: i32, %arg1: i32, %arg2: memref<1x128x128xf32, #tpu.memory_space<vmem>>, %arg3: memref<1x32x1xf32, #tpu.memory_space<vmem>>, %arg4: memref<8x256xf32, #tpu.memory_space<vmem>>, %arg5: memref<128x4xf32, #tpu.memory_space<vmem>>, %arg6: memref<32x128xf32, #tpu.memory_space<vmem>>, %arg7: memref<1x32x128xf32, #tpu.memory_space<vmem>>) attributes {dimension_semantics = [#tpu.dimension_semantics<parallel>, #tpu.dimension_semantics<parallel>], iteration_bounds = array<i64: 2, 2>, scalar_prefetch = 0 : i64, scratch_operands = 0 : i64, tpu.core_type = #tpu.core_type<tc>, window_params = [{transform_indices = @transform_0, window_bounds = array<i64: 1, 128, 128>}, {transform_indices = @transform_1, window_bounds = array<i64: 1, 32, 1>}, {pipeline_mode = #tpu.pipeline_mode<synchronous>, transform_indices = @transform_2, window_bounds = array<i64: 8, 256>}, {pipeline_mode = #tpu.pipeline_mode<synchronous>, transform_indices = @transform_3, window_bounds = array<i64: 128, 4>}, {pipeline_mode = #tpu.pipeline_mode<synchronous>, transform_indices = @transform_4, window_bounds = array<i64: 32, 128>}, {transform_indices = @transform_5, window_bounds = array<i64: 1, 32, 128>}]} {
    %c0 = arith.constant 0 : index
    %c0_0 = arith.constant 0 : index
    %c0_1 = arith.constant 0 : index
    %0 = vector.load %arg2[%c0, %c0_0, %c0_1] : memref<1x128x128xf32, #tpu.memory_space<vmem>>, vector<1x128x128xf32>
    %1 = vector.shape_cast %0 : vector<1x128x128xf32> to vector<128x128xf32>
    %2 = arith.mulf %1, %1 : vector<128x128xf32>
    %3 = tpu.concatenate %1, %2 in 0 : vector<128x128xf32>, vector<128x128xf32> -> vector<256x128xf32>
    %c0_2 = arith.constant 0 : index
    %c0_3 = arith.constant 0 : index
    %4 = vector.load %arg4[%c0_2, %c0_3] : memref<8x256xf32, #tpu.memory_space<vmem>>, vector<8x256xf32>
    %cst = arith.constant dense<0.000000e+00> : vector<8x128xf32>
    %5 = tpu.matmul %4, %3, %cst {dimension_numbers = #tpu.dot_dimension_numbers<[1], [0], [0], [1], [0, 0, 1, 1], [], []>} : vector<8x256xf32>, vector<256x128xf32>, vector<8x128xf32> -> vector<8x128xf32>
    %6 = vector.extract_strided_slice %5 {offsets = [0, 0], sizes = [4, 128], strides = [1, 1]} : vector<8x128xf32> to vector<4x128xf32>
    %cst_4 = arith.constant 3.125000e-02 : f32
    %7 = vector.broadcast %cst_4 : f32 to vector<4x128xf32>
    %8 = arith.mulf %6, %7 : vector<4x128xf32>
    %9 = vector.extract_strided_slice %5 {offsets = [4, 0], sizes = [4, 128], strides = [1, 1]} : vector<8x128xf32> to vector<4x128xf32>
    %cst_5 = arith.constant 3.125000e-02 : f32
    %10 = vector.broadcast %cst_5 : f32 to vector<4x128xf32>
    %11 = arith.mulf %9, %10 : vector<4x128xf32>
    %12 = arith.mulf %8, %8 : vector<4x128xf32>
    %13 = arith.subf %11, %12 : vector<4x128xf32>
    %cst_6 = arith.constant 0.000000e+00 : f32
    %14 = vector.broadcast %cst_6 : f32 to vector<4x128xf32>
    %15 = arith.maximumf %13, %14 : vector<4x128xf32>
    %cst_7 = arith.constant 9.99999974E-6 : f32
    %16 = vector.broadcast %cst_7 : f32 to vector<4x128xf32>
    %17 = arith.addf %15, %16 : vector<4x128xf32>
    %18 = math.rsqrt %17 : vector<4x128xf32>
    %c0_8 = arith.constant 0 : index
    %c0_9 = arith.constant 0 : index
    %19 = vector.load %arg5[%c0_8, %c0_9] : memref<128x4xf32, #tpu.memory_space<vmem>>, vector<128x4xf32>
    %cst_10 = arith.constant dense<0.000000e+00> : vector<128x128xf32>
    %20 = tpu.matmul %19, %8, %cst_10 {dimension_numbers = #tpu.dot_dimension_numbers<[1], [0], [0], [1], [0, 0, 1, 1], [], []>} : vector<128x4xf32>, vector<4x128xf32>, vector<128x128xf32> -> vector<128x128xf32>
    %c0_11 = arith.constant 0 : index
    %c0_12 = arith.constant 0 : index
    %21 = vector.load %arg5[%c0_11, %c0_12] : memref<128x4xf32, #tpu.memory_space<vmem>>, vector<128x4xf32>
    %cst_13 = arith.constant dense<0.000000e+00> : vector<128x128xf32>
    %22 = tpu.matmul %21, %18, %cst_13 {dimension_numbers = #tpu.dot_dimension_numbers<[1], [0], [0], [1], [0, 0, 1, 1], [], []>} : vector<128x4xf32>, vector<4x128xf32>, vector<128x128xf32> -> vector<128x128xf32>
    %23 = arith.subf %1, %20 : vector<128x128xf32>
    %24 = arith.mulf %23, %22 : vector<128x128xf32>
    %c0_14 = arith.constant 0 : index
    %c0_15 = arith.constant 0 : index
    %25 = vector.load %arg6[%c0_14, %c0_15] : memref<32x128xf32, #tpu.memory_space<vmem>>, vector<32x128xf32>
    %cst_16 = arith.constant dense<0.000000e+00> : vector<32x128xf32>
    %26 = tpu.matmul %25, %24, %cst_16 {dimension_numbers = #tpu.dot_dimension_numbers<[1], [0], [0], [1], [0, 0, 1, 1], [], []>} : vector<32x128xf32>, vector<128x128xf32>, vector<32x128xf32> -> vector<32x128xf32>
    %c0_17 = arith.constant 0 : index
    %c0_18 = arith.constant 0 : index
    %c0_19 = arith.constant 0 : index
    %27 = vector.load %arg3[%c0_17, %c0_18, %c0_19] : memref<1x32x1xf32, #tpu.memory_space<vmem>>, vector<1x32x1xf32>
    %28 = vector.shape_cast %27 : vector<1x32x1xf32> to vector<32x1xf32>
    %29 = vector.broadcast %28 : vector<32x1xf32> to vector<32x128xf32>
    %30 = arith.addf %26, %29 : vector<32x128xf32>
    %31 = vector.shape_cast %30 : vector<32x128xf32> to vector<4x8x128xf32>
    %cst_20 = arith.constant dense<0xFF800000> : vector<4x128xf32>
    %32 = vector.multi_reduction <maximumf>, %31, %cst_20 [1] : vector<4x8x128xf32> to vector<4x128xf32>
    %33 = vector.shape_cast %32 : vector<4x128xf32> to vector<4x1x128xf32>
    %34 = vector.broadcast %33 : vector<4x1x128xf32> to vector<4x8x128xf32>
    %35 = arith.subf %31, %34 : vector<4x8x128xf32>
    %36 = math.exp %35 : vector<4x8x128xf32>
    %cst_21 = arith.constant dense<0.000000e+00> : vector<4x128xf32>
    %37 = vector.multi_reduction <add>, %36, %cst_21 [1] : vector<4x8x128xf32> to vector<4x128xf32>
    %38 = vector.shape_cast %37 : vector<4x128xf32> to vector<4x1x128xf32>
    %39 = vector.broadcast %38 : vector<4x1x128xf32> to vector<4x8x128xf32>
    %40 = arith.divf %36, %39 : vector<4x8x128xf32>
    %41 = vector.shape_cast %40 : vector<4x8x128xf32> to vector<32x128xf32>
    %c0_22 = arith.constant 0 : index
    %c0_23 = arith.constant 0 : index
    %c0_24 = arith.constant 0 : index
    %42 = vector.load %arg7[%c0_22, %c0_23, %c0_24] : memref<1x32x128xf32, #tpu.memory_space<vmem>>, vector<1x32x128xf32>
    %43 = vector.shape_cast %42 : vector<1x32x128xf32> to vector<32x128xf32>
    %44 = vector.shape_cast %41 : vector<32x128xf32> to vector<1x32x128xf32>
    tpu.vector_store %arg7[%c0_22, %c0_23, %c0_24], %44 {strides = array<i32>} : memref<1x32x128xf32, #tpu.memory_space<vmem>>, vector<1x32x128xf32>,
    return
  }
  func.func @transform_0(%arg0: i32, %arg1: i32) -> (i32, i32, i32) {
    %c0_i32 = arith.constant 0 : i32
    %c0_i32_0 = arith.constant 0 : i32
    return %arg0, %c0_i32, %arg1 : i32, i32, i32
  }
  func.func @transform_1(%arg0: i32, %arg1: i32) -> (i32, i32, i32) {
    %c0_i32 = arith.constant 0 : i32
    %c0_i32_0 = arith.constant 0 : i32
    %c0_i32_1 = arith.constant 0 : i32
    return %arg0, %c0_i32, %c0_i32_0 : i32, i32, i32
  }
  func.func @transform_2(%arg0: i32, %arg1: i32) -> (i32, i32) {
    %c0_i32 = arith.constant 0 : i32
    %c0_i32_0 = arith.constant 0 : i32
    %c0_i32_1 = arith.constant 0 : i32
    return %c0_i32, %c0_i32_0 : i32, i32
  }
  func.func @transform_3(%arg0: i32, %arg1: i32) -> (i32, i32) {
    %c0_i32 = arith.constant 0 : i32
    %c0_i32_0 = arith.constant 0 : i32
    %c0_i32_1 = arith.constant 0 : i32
    return %c0_i32, %c0_i32_0 : i32, i32
  }
  func.func @transform_4(%arg0: i32, %arg1: i32) -> (i32, i32) {
    %c0_i32 = arith.constant 0 : i32
    %c0_i32_0 = arith.constant 0 : i32
    %c0_i32_1 = arith.constant 0 : i32
    return %c0_i32, %c0_i32_0 : i32, i32
  }
  func.func @transform_5(%arg0: i32, %arg1: i32) -> (i32, i32, i32) {
    %c0_i32 = arith.constant 0 : i32
    %c0_i32_0 = arith.constant 0 : i32
    return %arg0, %c0_i32, %arg1 : i32, i32, i32
  }
}

</mosaic_0001>

<llo_original>
// kernel: tpu_custom_call.1
$region0: #{tpu_custom_call.1}
  #allocation0 [shape = 'u32[]', space=smem, size = 0x4, offset = 0x4, fixed_abs, tag = 'smem constant byte address 0x4 - core index']
  #allocation1 [shape = 'u32[144,128]{1,0:T(1,128)}', space=vmem, size = 0x12000, scoped, tag = 'internal scratch']
  %s0 = inlined_call_operand.hbm [shape: f32[2,128,256], index: 0, kind: input, shape index: {}]
  %s1 = inlined_call_operand.vmem [shape: f32[2,32,1], index: 1, kind: input, shape index: {}]
  %s2 = inlined_call_operand.vmem [shape: f32[8,256], index: 2, kind: input, shape index: {}]
  %s3 = inlined_call_operand.vmem [shape: f32[128,4], index: 3, kind: input, shape index: {}]
  %s4 = inlined_call_operand.vmem [shape: f32[32,128], index: 4, kind: input, shape index: {}]
  %s5 = inlined_call_operand.hbm [shape: f32[2,32,256], index: 5, kind: output, shape index: {}]
  %s6 = sld [smem:[#allocation0]]
  $region57: #{tpu_custom_call.1} parent=0
    _
  %s8 = ssub.s32 1, %s6
  %s9 = scalar_select 0, %s8, %s6
  $region1: #{tpu_custom_call.1} parent=0
    #allocation2 [shape = 'u8[131072]{0}', space=vmem, size = 0x20000, scoped, tag = 'input window, operand 0']
    #allocation3 [shape = 's32[2]{0}', space=sflag, size = 0x8, scoped, tag = 'scoped memory for tpu_custom_call.1']
    #allocation4 [shape = 's32[2]{0}', space=sflag, size = 0x8, scoped, tag = 'scoped memory for tpu_custom_call.1']
    #allocation5 [shape = 'u8[32768]{0}', space=vmem, size = 0x8000, scoped, tag = 'output window, operand 0']
    %10 = vsyncpa [#allocation3], 0
    %s11 = scalar_lea.sflag [#allocation3], 1
    %12 = vsyncpa %s11, 0
    %13 = vsyncpa [#allocation4], 0
    %s14 = scalar_lea.sflag [#allocation4], 1
    %15 = vsyncpa %s14, 0
    loop: start=0, step=1, limit=6
    $region2: #{tpu_custom_call.1} parent=1 // loop_pre_header
      _
    $region3: #{tpu_custom_call.1} parent=1 // loop_header
      %s17 = sphi 0, %s21
      %p18 = scmp.ge.s32.totalorder %s17, 6
      %s24 = sphi 0, %s36
      %s25 = sphi 0, %s32
      %s26 = sphi 0, %s24
      %s27 = sphi 0, %s25
      %s28 = sphi 0, %s26
      %s29 = sphi 0, %s27
      %s41 = sphi 0, %s43
      %s44 = sphi 0, %s41
      %s45 = sphi 0, %s44
      %s61 = sphi 0, %s45
      %s67 = sphi 0, %s69
      %s70 = sphi 0, %s67
      %s71 = sphi 0, %s70
      %s87 = sphi 0, %s71
      %s91 = sphi 0, %s91
      %s93 = sphi 0, %s91
      %s94 = sphi 0, %s93
      %s108 = sphi 0, %s94
      %s112 = sphi 0, %s112
      %s114 = sphi 0, %s112
      %s115 = sphi 0, %s114
      %s129 = sphi 0, %s115
      %s133 = sphi 0, %s133
      %s135 = sphi 0, %s133
      %s136 = sphi 0, %s135
      %s150 = sphi 0, %s136
      %s158 = sphi 0, %s160
      %s161 = sphi 0, %s158
      %s162 = sphi 0, %s161
      %s178 = sphi 0, %s162
    $region4: #{tpu_custom_call.1} parent=1 // loop_header_branch
      %20 = sbr.rel (%p18) target = $region8
    $region5: #{tpu_custom_call.1} parent=1 // loop_body
      %s22 = ssub.s32 %s17, 1
      %s23 = ssub.s32 %s17, 2
      %s30 = sadd.s32 1, %s25
      %p31 = scmp.ge.s32.totalorder %s30, 2
      %s32 = scalar_select %p31, 0, %s30
      %s33 = sadd.s32 1, %s24
      %s34 = scalar_select %p31, %s33, %s24
      %p35 = scmp.ge.s32.totalorder %s34, 2
      %s36 = scalar_select %p35, 0, %s34
      %s37 = ssub.s32 %s24, %s36
      %s38 = ssub.s32 %s25, %s32
      %s39 = sor.u32 %s37, %s38
      %p40 = scmp.eq.s32.totalorder %s39, 0
      %s42 = sadd.s32 %s41, 1
      %s43 = scalar_select %p40, %s41, %s42
      %p46 = pneg %p40
      %p47 = scmp.eq.s32.totalorder %s17, 3
      %p48 = por %p46, %p47
      %p49 = scmp.ne.s32.totalorder %s41, %s44
      %p50 = scmp.eq.s32.totalorder %s17, 0
      %p51 = por %p49, %p50
      %p52 = scmp.ne.s32.totalorder %s41, %s44
      %p53 = scmp.eq.s32.totalorder %s22, 3
      %p54 = por %p52, %p53
      %p55 = scmp.ne.s32.totalorder %s44, %s45
      %p56 = scmp.eq.s32.totalorder %s22, 0
      %p57 = por %p55, %p56
      %p58 = scmp.ne.s32.totalorder %s44, %s45
      %p59 = scmp.eq.s32.totalorder %s23, 3
      %p60 = por %p58, %p59
      %p62 = scmp.ne.s32.totalorder %s45, %s61
      %p63 = scmp.eq.s32.totalorder %s23, 0
      %p64 = por %p62, %p63
      %s65 = ssub.s32 %s24, %s36
      %p66 = scmp.eq.s32.totalorder %s65, 0
      %s68 = sadd.s32 %s67, 1
      %s69 = scalar_select %p66, %s67, %s68
      %p72 = pneg %p66
      %p73 = scmp.eq.s32.totalorder %s17, 3
      %p74 = por %p72, %p73
      %p75 = scmp.ne.s32.totalorder %s67, %s70
      %p76 = scmp.eq.s32.totalorder %s17, 0
      %p77 = por %p75, %p76
      %p78 = scmp.ne.s32.totalorder %s67, %s70
      %p79 = scmp.eq.s32.totalorder %s22, 3
      %p80 = por %p78, %p79
      %p81 = scmp.ne.s32.totalorder %s70, %s71
      %p82 = scmp.eq.s32.totalorder %s22, 0
      %p83 = por %p81, %p82
      %p84 = scmp.ne.s32.totalorder %s70, %s71
      %p85 = scmp.eq.s32.totalorder %s23, 3
      %p86 = por %p84, %p85
      %p88 = scmp.ne.s32.totalorder %s71, %s87
      %p89 = scmp.eq.s32.totalorder %s23, 0
      %p90 = por %p88, %p89
      %s92 = sadd.s32 %s91, 1
      %p95 = scmp.eq.s32.totalorder %s17, 3
      %p96 = scmp.ne.s32.totalorder %s91, %s93
      %p97 = scmp.eq.s32.totalorder %s17, 0
      %p98 = por %p96, %p97
      %p99 = scmp.ne.s32.totalorder %s91, %s93
      %p100 = scmp.eq.s32.totalorder %s22, 3
      %p101 = por %p99, %p100
      %p102 = scmp.ne.s32.totalorder %s93, %s94
      %p103 = scmp.eq.s32.totalorder %s22, 0
      %p104 = por %p102, %p103
      %p105 = scmp.ne.s32.totalorder %s93, %s94
      %p106 = scmp.eq.s32.totalorder %s23, 3
      %p107 = por %p105, %p106
      %p109 = scmp.ne.s32.totalorder %s94, %s108
      %p110 = scmp.eq.s32.totalorder %s23, 0
      %p111 = por %p109, %p110
      %s113 = sadd.s32 %s112, 1
      %p116 = scmp.eq.s32.totalorder %s17, 3
      %p117 = scmp.ne.s32.totalorder %s112, %s114
      %p118 = scmp.eq.s32.totalorder %s17, 0
      %p119 = por %p117, %p118
      %p120 = scmp.ne.s32.totalorder %s112, %s114
      %p121 = scmp.eq.s32.totalorder %s22, 3
      %p122 = por %p120, %p121
      %p123 = scmp.ne.s32.totalorder %s114, %s115
      %p124 = scmp.eq.s32.totalorder %s22, 0
      %p125 = por %p123, %p124
      %p126 = scmp.ne.s32.totalorder %s114, %s115
      %p127 = scmp.eq.s32.totalorder %s23, 3
      %p128 = por %p126, %p127
      %p130 = scmp.ne.s32.totalorder %s115, %s129
      %p131 = scmp.eq.s32.totalorder %s23, 0
      %p132 = por %p130, %p131
      %s134 = sadd.s32 %s133, 1
      %p137 = scmp.eq.s32.totalorder %s17, 3
      %p138 = scmp.ne.s32.totalorder %s133, %s135
      %p139 = scmp.eq.s32.totalorder %s17, 0
      %p140 = por %p138, %p139
      %p141 = scmp.ne.s32.totalorder %s133, %s135
      %p142 = scmp.eq.s32.totalorder %s22, 3
      %p143 = por %p141, %p142
      %p144 = scmp.ne.s32.totalorder %s135, %s136
      %p145 = scmp.eq.s32.totalorder %s22, 0
      %p146 = por %p144, %p145
      %p147 = scmp.ne.s32.totalorder %s135, %s136
      %p148 = scmp.eq.s32.totalorder %s23, 3
      %p149 = por %p147, %p148
      %p151 = scmp.ne.s32.totalorder %s136, %s150
      %p152 = scmp.eq.s32.totalorder %s23, 0
      %p153 = por %p151, %p152
      %s154 = ssub.s32 %s24, %s36
      %s155 = ssub.s32 %s25, %s32
      %s156 = sor.u32 %s154, %s155
      %p157 = scmp.eq.s32.totalorder %s156, 0
      %s159 = sadd.s32 %s158, 1
      %s160 = scalar_select %p157, %s158, %s159
      %p163 = pneg %p157
      %p164 = scmp.eq.s32.totalorder %s17, 3
      %p165 = por %p163, %p164
      %p166 = scmp.ne.s32.totalorder %s158, %s161
      %p167 = scmp.eq.s32.totalorder %s17, 0
      %p168 = por %p166, %p167
      %p169 = scmp.ne.s32.totalorder %s158, %s161
      %p170 = scmp.eq.s32.totalorder %s22, 3
      %p171 = por %p169, %p170
      %p172 = scmp.ne.s32.totalorder %s161, %s162
      %p173 = scmp.eq.s32.totalorder %s22, 0
      %p174 = por %p172, %p173
      %p175 = scmp.ne.s32.totalorder %s161, %s162
      %p176 = scmp.eq.s32.totalorder %s23, 3
      %p177 = por %p175, %p176
      %p179 = scmp.ne.s32.totalorder %s162, %s178
      %p180 = scmp.eq.s32.totalorder %s23, 0
      %p181 = por %p179, %p180
      %p182 = scmp.le.s32.totalorder 1, %s17
      %p183 = scmp.lt.s32.totalorder %s17, 5
      %p184 = pnand %p182, %p183
      %p185 = pneg %p184
      // Predicated region
      $region9: #{tpu_custom_call.1} parent=5 // pred_check
        _
      $region10: #{tpu_custom_call.1} parent=5 // pred_check_branch
        %187 = sbr.rel (%p184) target = $region12
      $region11: #{tpu_custom_call.1} parent=5 // pred_region
        %s188 = ssub.s32 %s17, 1
        // Predicated region
        $region13: #{tpu_custom_call.1} parent=11 // pred_check
          %p189 = pneg %p104
        $region14: #{tpu_custom_call.1} parent=11 // pred_check_branch
          %191 = sbr.rel (%p189) target = $region16
        $region15: #{tpu_custom_call.1} parent=11 // pred_region
          _
        $region16: #{tpu_custom_call.1} parent=11 // pred_fallthru
          _
        // Predicated region
        $region17: #{tpu_custom_call.1} parent=11 // pred_check
          %p192 = pneg %p125
        $region18: #{tpu_custom_call.1} parent=11 // pred_check_branch
          %194 = sbr.rel (%p192) target = $region20
        $region19: #{tpu_custom_call.1} parent=11 // pred_region
          _
        $region20: #{tpu_custom_call.1} parent=11 // pred_fallthru
          _
        // Predicated region
        $region21: #{tpu_custom_call.1} parent=11 // pred_check
          %p195 = pneg %p146
        $region22: #{tpu_custom_call.1} parent=11 // pred_check_branch
          %197 = sbr.rel (%p195) target = $region24
        $region23: #{tpu_custom_call.1} parent=11 // pred_region
          _
        $region24: #{tpu_custom_call.1} parent=11 // pred_fallthru
          _
      $region12: #{tpu_custom_call.1} parent=5 // pred_fallthru
        _
      %p198 = scmp.lt.s32.totalorder %s17, 4
      // Predicated region
      $region25: #{tpu_custom_call.1} parent=5 // pred_check
        %p199 = pneg %p198
      $region26: #{tpu_custom_call.1} parent=5 // pred_check_branch
        %201 = sbr.rel (%p199) target = $region28
      $region27: #{tpu_custom_call.1} parent=5 // pred_region
        // Predicated region
        $region29: #{tpu_custom_call.1} parent=27 // pred_check
          %p202 = pneg %p51
        $region30: #{tpu_custom_call.1} parent=27 // pred_check_branch
          %204 = sbr.rel (%p202) target = $region32
        $region31: #{tpu_custom_call.1} parent=27 // pred_region
          %s205 = sand.u32 %s41, 1
          %s206 = scalar_lea.sflag [#allocation3], %s205
          %s207 = sand.u32 %s41, 1
          %s208 = smul.addr %s207, 128
          %s209 = scalar_lea.vmem [#allocation2], %s208
          %s211 = ssub.s32 2048, 2048
          %212 = vsyncadd %s206, %s211
          %s213 = smul.addr %s24, 32
          %s214 = sadd.s32 %s25, %s213
          %s215 = smul.addr %s214, 128
          %s216 = scalar_lea.hbm %s0, %s215
          %s217 = sshll.u32 %s209, 4
          %s218 = int_to_ptr.vmem [resolvable:$true] %s217
          %223 = dma.hbm_to_vmem [thread:$0]  %s216, 2048, %s218, %s206, 256, 128, 8
        $region32: #{tpu_custom_call.1} parent=27 // pred_fallthru
          _
        // Predicated region
        $region33: #{tpu_custom_call.1} parent=27 // pred_check
          %p224 = pneg %p77
        $region34: #{tpu_custom_call.1} parent=27 // pred_check_branch
          %226 = sbr.rel (%p224) target = $region36
        $region35: #{tpu_custom_call.1} parent=27 // pred_region
          %p227 = scmp.lt.s32.totalorder %s24, 1
          %s228 = scalar_select %p227, %s24, 1
          %s229 = smul.addr %s228, 4
          %s230 = smul.addr %s229, 8
          %s231 = scalar_lea.vmem %s1, %s230
        $region36: #{tpu_custom_call.1} parent=27 // pred_fallthru
          _
      $region28: #{tpu_custom_call.1} parent=5 // pred_fallthru
        _
      %p232 = scmp.le.s32.totalorder 1, %s17
      %p233 = scmp.lt.s32.totalorder %s17, 5
      %p234 = pnand %p232, %p233
      %p235 = pneg %p234
      // Predicated region
      $region37: #{tpu_custom_call.1} parent=5 // pred_check
        _
      $region38: #{tpu_custom_call.1} parent=5 // pred_check_branch
        %237 = sbr.rel (%p234) target = $region40
      $region39: #{tpu_custom_call.1} parent=5 // pred_region
        %s238 = ssub.s32 %s17, 1
        %s239 = sand.u32 %s44, 1
        %s240 = scalar_lea.sflag [#allocation3], %s239
        %s241 = sand.u32 %s44, 1
        %s242 = smul.addr %s241, 128
        %s243 = scalar_lea.vmem [#allocation2], %s242
        // Predicated region
        $region41: #{tpu_custom_call.1} parent=39 // pred_check
          %p244 = pneg %p57
        $region42: #{tpu_custom_call.1} parent=39 // pred_check_branch
          %246 = sbr.rel (%p244) target = $region44
        $region43: #{tpu_custom_call.1} parent=39 // pred_region
          %247 = dma.done %s240, 2048
        $region44: #{tpu_custom_call.1} parent=39 // pred_fallthru
          _
        %s248 = sand.u32 %s44, 1
        %s249 = scalar_lea.sflag [#allocation3], %s248
        %s250 = sand.u32 %s44, 1
        %s251 = smul.addr %s250, 128
        %s252 = scalar_lea.vmem [#allocation2], %s251
        %p253 = pneg %p57
        %p254 = pneg %p54
        %p255 = scmp.lt.s32.totalorder %s26, 1
        %s256 = scalar_select %p255, %s26, 1
        %s257 = smul.addr %s256, 4
        %s258 = smul.addr %s257, 8
        %s259 = scalar_lea.vmem %s1, %s258
        %p260 = pneg %p83
        %p261 = pneg %p80
        %p262 = pneg %p104
        %p263 = pneg %p101
        %p264 = pneg %p125
        %p265 = pneg %p122
        %p266 = pneg %p146
        %p267 = pneg %p143
        %p268 = pneg %p174
        %p269 = pneg %p171
        %s270 = sand.u32 %s161, 1
        %s271 = scalar_lea.sflag [#allocation4], %s270
        %s272 = sand.u32 %s161, 1
        %s273 = smul.addr %s272, 32
        %s274 = scalar_lea.vmem [#allocation5], %s273
        %p275 = scmp.lt.s32.totalorder %s26, 1
        %s276 = scalar_select %p275, %s26, 1
        %s277 = smul.addr %s276, 4
        %s278 = smul.addr %s277, 8
        %s279 = scalar_lea.vmem %s1, %s278
        %v280 = vld [vmem:[%s243] sm:$0xff]
        %v281 = vld [vmem:[%s243 + $0x8] sm:$0xff]
        %v282 = vld [vmem:[%s243 + $0x10] sm:$0xff]
        %v283 = vld [vmem:[%s243 + $0x18] sm:$0xff]
        %v284 = vld [vmem:[%s243 + $0x20] sm:$0xff]
        %v285 = vld [vmem:[%s243 + $0x28] sm:$0xff]
        %v286 = vld [vmem:[%s243 + $0x30] sm:$0xff]
        %v287 = vld [vmem:[%s243 + $0x38] sm:$0xff]
        %v288 = vld [vmem:[%s243 + $0x40] sm:$0xff]
        %v289 = vld [vmem:[%s243 + $0x48] sm:$0xff]
        %v290 = vld [vmem:[%s243 + $0x50] sm:$0xff]
        %v291 = vld [vmem:[%s243 + $0x58] sm:$0xff]
        %v292 = vld [vmem:[%s243 + $0x60] sm:$0xff]
        %v293 = vld [vmem:[%s243 + $0x68] sm:$0xff]
        %v294 = vld [vmem:[%s243 + $0x70] sm:$0xff]
        %v295 = vld [vmem:[%s243 + $0x78] sm:$0xff]
        %v296 = vmul.f32 %v280, %v280
        %v297 = vmul.f32 %v281, %v281
        %v298 = vmul.f32 %v282, %v282
        %v299 = vmul.f32 %v283, %v283
        %v300 = vmul.f32 %v284, %v284
        %v301 = vmul.f32 %v285, %v285
        %v302 = vmul.f32 %v286, %v286
        %v303 = vmul.f32 %v287, %v287
        %v304 = vmul.f32 %v288, %v288
        %v305 = vmul.f32 %v289, %v289
        %v306 = vmul.f32 %v290, %v290
        %v307 = vmul.f32 %v291, %v291
        %v308 = vmul.f32 %v292, %v292
        %v309 = vmul.f32 %v293, %v293
        %v310 = vmul.f32 %v294, %v294
        %v311 = vmul.f32 %v295, %v295
        %v312 = vld [vmem:[%s2] sm:$0xff]
        %v313 = vld [vmem:[%s2 + $0x8] sm:$0xff]
        %314 = vmatprep.subr.mxu0 0.0
        %315 = vmatpush1.msra.mxu0 %v280
        %316 = vmatprep.subr.mxu0 0.0
        %317 = vmatpush1.msra.mxu0 %v281
        %318 = vmatprep.subr.mxu0 0.0
        %319 = vmatpush1.msra.mxu0 %v282
        %320 = vmatprep.subr.mxu0 0.0
        %321 = vmatpush1.msra.mxu0 %v283
        %322 = vmatprep.subr.mxu0 0.0
        %323 = vmatpush1.msra.mxu0 %v284
        %324 = vmatprep.subr.mxu0 0.0
        %325 = vmatpush1.msra.mxu0 %v285
        %326 = vmatprep.subr.mxu0 0.0
        %327 = vmatpush1.msra.mxu0 %v286
        %328 = vmatprep.subr.mxu0 0.0
        %329 = vmatpush1.msra.mxu0 %v287
        %330 = vmatprep.subr.mxu0 0.0
        %331 = vmatpush1.msra.mxu0 %v288
        %332 = vmatprep.subr.mxu0 0.0
        %333 = vmatpush1.msra.mxu0 %v289
        %334 = vmatprep.subr.mxu0 0.0
        %335 = vmatpush1.msra.mxu0 %v290
        %336 = vmatprep.subr.mxu0 0.0
        %337 = vmatpush1.msra.mxu0 %v291
        %338 = vmatprep.subr.mxu0 0.0
        %339 = vmatpush1.msra.mxu0 %v292
        %340 = vmatprep.subr.mxu0 0.0
        %341 = vmatpush1.msra.mxu0 %v293
        %342 = vmatprep.subr.mxu0 0.0
        %343 = vmatpush1.msra.mxu0 %v294
        %344 = vmatprep.subr.mxu0 0.0
        %345 = vmatpush1.msra.mxu0 %v295
        %346 = vmatprep.subr.mxu0 0.0
        %347 = vmatpush1.msra.mxu0 %v296
        %348 = vmatprep.subr.mxu0 0.0
        %349 = vmatpush1.msra.mxu0 %v297
        %350 = vmatprep.subr.mxu0 0.0
        %351 = vmatpush1.msra.mxu0 %v298
        %352 = vmatprep.subr.mxu0 0.0
        %353 = vmatpush1.msra.mxu0 %v299
        %354 = vmatprep.subr.mxu0 0.0
        %355 = vmatpush1.msra.mxu0 %v300
        %356 = vmatprep.subr.mxu0 0.0
        %357 = vmatpush1.msra.mxu0 %v301
        %358 = vmatprep.subr.mxu0 0.0
        %359 = vmatpush1.msra.mxu0 %v302
        %360 = vmatprep.subr.mxu0 0.0
        %361 = vmatpush1.msra.mxu0 %v303
        %362 = vmatprep.subr.mxu0 0.0
        %363 = vmatpush1.msra.mxu0 %v304
        %364 = vmatprep.subr.mxu0 0.0
        %365 = vmatpush1.msra.mxu0 %v305
        %366 = vmatprep.subr.mxu0 0.0
        %367 = vmatpush1.msra.mxu0 %v306
        %368 = vmatprep.subr.mxu0 0.0
        %369 = vmatpush1.msra.mxu0 %v307
        %370 = vmatprep.subr.mxu0 0.0
        %371 = vmatpush1.msra.mxu0 %v308
        %372 = vmatprep.subr.mxu0 0.0
        %373 = vmatpush1.msra.mxu0 %v309
        %374 = vmatprep.subr.mxu0 0.0
        %375 = vmatpush1.msra.mxu0 %v310
        %376 = vmatprep.subr.mxu0 0.0
        %377 = vmatpush1.msra.mxu0 %v311
        %378 = vmatprep.mubr.f32.mxu0 %v313
        %379 = vmatmul.mubr.f32.gmra.mrb[0].mxu0 %v312
        %v380 = vpop.f32.mrb[0].mxu0
        %v381 = vadd.f32 0.0, %v380
        %v382 = vpop.f32.mrb[0].mxu0
        %383 = vdwg.mxu0
        %v384 = vmul.f32 %v381, 0.03125
        %v385 = vmul.f32 %v384, %v384
        %v387 = vrot.slane %v385, 4
        %v389 = vsub.f32 %v384, %v387
        %v390 = vmax.f32 %v389, 0.0
        %v391 = vadd.f32 %v390, 1e-05
        %v392 = vrsqrt.pop %v391
        %v393 = vld [vmem:[%s3] sm:$0xff]
        %v394 = vld [vmem:[%s3 + $0x8] sm:$0xff]
        %v395 = vld [vmem:[%s3 + $0x10] sm:$0xff]
        %v396 = vld [vmem:[%s3 + $0x18] sm:$0xff]
        %v397 = vld [vmem:[%s3 + $0x20] sm:$0xff]
        %v398 = vld [vmem:[%s3 + $0x28] sm:$0xff]
        %v399 = vld [vmem:[%s3 + $0x30] sm:$0xff]
        %v400 = vld [vmem:[%s3 + $0x38] sm:$0xff]
        %v401 = vld [vmem:[%s3 + $0x40] sm:$0xff]
        %v402 = vld [vmem:[%s3 + $0x48] sm:$0xff]
        %v403 = vld [vmem:[%s3 + $0x50] sm:$0xff]
        %v404 = vld [vmem:[%s3 + $0x58] sm:$0xff]
        %v405 = vld [vmem:[%s3 + $0x60] sm:$0xff]
        %v406 = vld [vmem:[%s3 + $0x68] sm:$0xff]
        %v407 = vld [vmem:[%s3 + $0x70] sm:$0xff]
        %v408 = vld [vmem:[%s3 + $0x78] sm:$0xff]
        %vm409 = vcmask 31744
        %v411 = vsel %vm409, %v393, 0
        %v414 = vsel %vm409, %v394, 0
        %v417 = vsel %vm409, %v395, 0
        %v420 = vsel %vm409, %v396, 0
        %v423 = vsel %vm409, %v397, 0
        %v426 = vsel %vm409, %v398, 0
        %v429 = vsel %vm409, %v399, 0
        %v432 = vsel %vm409, %v400, 0
        %v435 = vsel %vm409, %v401, 0
        %v438 = vsel %vm409, %v402, 0
        %v441 = vsel %vm409, %v403, 0
        %v444 = vsel %vm409, %v404, 0
        %v447 = vsel %vm409, %v405, 0
        %v450 = vsel %vm409, %v406, 0
        %v453 = vsel %vm409, %v407, 0
        %v456 = vsel %vm409, %v408, 0
        %vm458 = vcmask 1043456
        %v460 = vsel %vm458, %v384, 0
        %462 = vmatprep.subr.mxu0 0.0
        %463 = vmatpush1.msra.mxu0 %v460
        %464 = vmatprep.subr.mxu0 0.0
        %465 = vmatpush1.msra.mxu0 0.0
        %466 = vmatprep.subr.mxu0 0.0
        %467 = vmatpush1.msra.mxu0 0.0
        %468 = vmatprep.subr.mxu0 0.0
        %469 = vmatpush1.msra.mxu0 0.0
        %470 = vmatprep.subr.mxu0 0.0
        %471 = vmatpush1.msra.mxu0 0.0
        %472 = vmatprep.subr.mxu0 0.0
        %473 = vmatpush1.msra.mxu0 0.0
        %474 = vmatprep.subr.mxu0 0.0
        %475 = vmatpush1.msra.mxu0 0.0
        %476 = vmatprep.subr.mxu0 0.0
        %477 = vmatpush1.msra.mxu0 0.0
        %478 = vmatprep.subr.mxu0 0.0
        %479 = vmatpush1.msra.mxu0 0.0
        %480 = vmatprep.subr.mxu0 0.0
        %481 = vmatpush1.msra.mxu0 0.0
        %482 = vmatprep.subr.mxu0 0.0
        %483 = vmatpush1.msra.mxu0 0.0
        %484 = vmatprep.subr.mxu0 0.0
        %485 = vmatpush1.msra.mxu0 0.0
        %486 = vmatprep.subr.mxu0 0.0
        %487 = vmatpush1.msra.mxu0 0.0
        %488 = vmatprep.subr.mxu0 0.0
        %489 = vmatpush1.msra.mxu0 0.0
        %490 = vmatprep.subr.mxu0 0.0
        %491 = vmatpush1.msra.mxu0 0.0
        %492 = vmatprep.subr.mxu0 0.0
        %493 = vmatpush1.msra.mxu0 0.0
        %494 = vmatprep.subr.mxu0 0.0
        %495 = vmatpush1.msra.mxu0 0.0
        %496 = vmatprep.subr.mxu0 0.0
        %497 = vmatpush1.msra.mxu0 0.0
        %498 = vmatprep.subr.mxu0 0.0
        %499 = vmatpush1.msra.mxu0 0.0
        %500 = vmatprep.subr.mxu0 0.0
        %501 = vmatpush1.msra.mxu0 0.0
        %502 = vmatprep.subr.mxu0 0.0
        %503 = vmatpush1.msra.mxu0 0.0
        %504 = vmatprep.subr.mxu0 0.0
        %505 = vmatpush1.msra.mxu0 0.0
        %506 = vmatprep.subr.mxu0 0.0
        %507 = vmatpush1.msra.mxu0 0.0
        %508 = vmatprep.subr.mxu0 0.0
        %509 = vmatpush1.msra.mxu0 0.0
        %510 = vmatprep.subr.mxu0 0.0
        %511 = vmatpush1.msra.mxu0 0.0
        %512 = vmatprep.subr.mxu0 0.0
        %513 = vmatpush1.msra.mxu0 0.0
        %514 = vmatprep.subr.mxu0 0.0
        %515 = vmatpush1.msra.mxu0 0.0
        %516 = vmatprep.subr.mxu0 0.0
        %517 = vmatpush1.msra.mxu0 0.0
        %518 = vmatprep.subr.mxu0 0.0
        %519 = vmatpush1.msra.mxu0 0.0
        %520 = vmatprep.subr.mxu0 0.0
        %521 = vmatpush1.msra.mxu0 0.0
        %522 = vmatprep.subr.mxu0 0.0
        %523 = vmatpush1.msra.mxu0 0.0
        %524 = vmatprep.subr.mxu0 0.0
        %525 = vmatpush1.msra.mxu0 0.0
        %526 = vmatprep.mubr.f32.mxu0 0.0
        %527 = vmatmul.mubr.f32.gmra.mrb[0].mxu0 %v411
        %v528 = vpop.f32.mrb[0].mxu0
        %v529 = vadd.f32 0.0, %v528
        %v530 = vpop.f32.mrb[0].mxu0
        %531 = vmatprep.mubr.f32.mxu0 0.0
        %532 = vmatmul.mubr.f32.gmra.mrb[0].mxu0 %v414
        %v533 = vpop.f32.mrb[0].mxu0
        %v534 = vadd.f32 0.0, %v533
        %v535 = vpop.f32.mrb[0].mxu0
        %536 = vmatprep.mubr.f32.mxu0 0.0
        %537 = vmatmul.mubr.f32.gmra.mrb[0].mxu0 %v417
        %v538 = vpop.f32.mrb[0].mxu0
        %v539 = vadd.f32 0.0, %v538
        %v540 = vpop.f32.mrb[0].mxu0
        %541 = vmatprep.mubr.f32.mxu0 0.0
        %542 = vmatmul.mubr.f32.gmra.mrb[0].mxu0 %v420
        %v543 = vpop.f32.mrb[0].mxu0
        %v544 = vadd.f32 0.0, %v543
        %v545 = vpop.f32.mrb[0].mxu0
        %546 = vmatprep.mubr.f32.mxu0 0.0
        %547 = vmatmul.mubr.f32.gmra.mrb[0].mxu0 %v423
        %v548 = vpop.f32.mrb[0].mxu0
        %v549 = vadd.f32 0.0, %v548
        %v550 = vpop.f32.mrb[0].mxu0
        %551 = vmatprep.mubr.f32.mxu0 0.0
        %552 = vmatmul.mubr.f32.gmra.mrb[0].mxu0 %v426
        %v553 = vpop.f32.mrb[0].mxu0
        %v554 = vadd.f32 0.0, %v553
        %v555 = vpop.f32.mrb[0].mxu0
        %556 = vmatprep.mubr.f32.mxu0 0.0
        %557 = vmatmul.mubr.f32.gmra.mrb[0].mxu0 %v429
        %v558 = vpop.f32.mrb[0].mxu0
        %v559 = vadd.f32 0.0, %v558
        %v560 = vpop.f32.mrb[0].mxu0
        %561 = vmatprep.mubr.f32.mxu0 0.0
        %562 = vmatmul.mubr.f32.gmra.mrb[0].mxu0 %v432
        %v563 = vpop.f32.mrb[0].mxu0
        %v564 = vadd.f32 0.0, %v563
        %v565 = vpop.f32.mrb[0].mxu0
        %566 = vmatprep.mubr.f32.mxu0 0.0
        %567 = vmatmul.mubr.f32.gmra.mrb[0].mxu0 %v435
        %v568 = vpop.f32.mrb[0].mxu0
        %v569 = vadd.f32 0.0, %v568
        %v570 = vpop.f32.mrb[0].mxu0
        %571 = vmatprep.mubr.f32.mxu0 0.0
        %572 = vmatmul.mubr.f32.gmra.mrb[0].mxu0 %v438
        %v573 = vpop.f32.mrb[0].mxu0
        %v574 = vadd.f32 0.0, %v573
        %v575 = vpop.f32.mrb[0].mxu0
        %576 = vmatprep.mubr.f32.mxu0 0.0
        %577 = vmatmul.mubr.f32.gmra.mrb[0].mxu0 %v441
        %v578 = vpop.f32.mrb[0].mxu0
        %v579 = vadd.f32 0.0, %v578
        %v580 = vpop.f32.mrb[0].mxu0
        %581 = vmatprep.mubr.f32.mxu0 0.0
        %582 = vmatmul.mubr.f32.gmra.mrb[0].mxu0 %v444
        %v583 = vpop.f32.mrb[0].mxu0
        %v584 = vadd.f32 0.0, %v583
        %v585 = vpop.f32.mrb[0].mxu0
        %586 = vmatprep.mubr.f32.mxu0 0.0
        %587 = vmatmul.mubr.f32.gmra.mrb[0].mxu0 %v447
        %v588 = vpop.f32.mrb[0].mxu0
        %v589 = vadd.f32 0.0, %v588
        %v590 = vpop.f32.mrb[0].mxu0
        %591 = vmatprep.mubr.f32.mxu0 0.0
        %592 = vmatmul.mubr.f32.gmra.mrb[0].mxu0 %v450
        %v593 = vpop.f32.mrb[0].mxu0
        %v594 = vadd.f32 0.0, %v593
        %v595 = vpop.f32.mrb[0].mxu0
        %596 = vmatprep.mubr.f32.mxu0 0.0
        %597 = vmatmul.mubr.f32.gmra.mrb[0].mxu0 %v453
        %v598 = vpop.f32.mrb[0].mxu0
        %v599 = vadd.f32 0.0, %v598
        %v600 = vpop.f32.mrb[0].mxu0
        %601 = vmatprep.mubr.f32.mxu0 0.0
        %602 = vmatmul.mubr.f32.gmra.mrb[0].mxu0 %v456
        %v603 = vpop.f32.mrb[0].mxu0
        %v604 = vadd.f32 0.0, %v603
        %v605 = vpop.f32.mrb[0].mxu0
        %606 = vdwg.mxu0
        %v608 = vrot.slane %v392, 4
        %v609 = vsel %vm458, %v608, 0
        %611 = vmatprep.subr.mxu0 0.0
        %612 = vmatpush1.msra.mxu0 %v609
        %613 = vmatprep.subr.mxu0 0.0
        %614 = vmatpush1.msra.mxu0 0.0
        %615 = vmatprep.subr.mxu0 0.0
        %616 = vmatpush1.msra.mxu0 0.0
        %617 = vmatprep.subr.mxu0 0.0
        %618 = vmatpush1.msra.mxu0 0.0
        %619 = vmatprep.subr.mxu0 0.0
        %620 = vmatpush1.msra.mxu0 0.0
        %621 = vmatprep.subr.mxu0 0.0
        %622 = vmatpush1.msra.mxu0 0.0
        %623 = vmatprep.subr.mxu0 0.0
        %624 = vmatpush1.msra.mxu0 0.0
        %625 = vmatprep.subr.mxu0 0.0
        %626 = vmatpush1.msra.mxu0 0.0
        %627 = vmatprep.subr.mxu0 0.0
        %628 = vmatpush1.msra.mxu0 0.0
        %629 = vmatprep.subr.mxu0 0.0
        %630 = vmatpush1.msra.mxu0 0.0
        %631 = vmatprep.subr.mxu0 0.0
        %632 = vmatpush1.msra.mxu0 0.0
        %633 = vmatprep.subr.mxu0 0.0
        %634 = vmatpush1.msra.mxu0 0.0
        %635 = vmatprep.subr.mxu0 0.0
        %636 = vmatpush1.msra.mxu0 0.0
        %637 = vmatprep.subr.mxu0 0.0
        %638 = vmatpush1.msra.mxu0 0.0
        %639 = vmatprep.subr.mxu0 0.0
        %640 = vmatpush1.msra.mxu0 0.0
        %641 = vmatprep.subr.mxu0 0.0
        %642 = vmatpush1.msra.mxu0 0.0
        %643 = vmatprep.subr.mxu0 0.0
        %644 = vmatpush1.msra.mxu0 0.0
        %645 = vmatprep.subr.mxu0 0.0
        %646 = vmatpush1.msra.mxu0 0.0
        %647 = vmatprep.subr.mxu0 0.0
        %648 = vmatpush1.msra.mxu0 0.0
        %649 = vmatprep.subr.mxu0 0.0
        %650 = vmatpush1.msra.mxu0 0.0
        %651 = vmatprep.subr.mxu0 0.0
        %652 = vmatpush1.msra.mxu0 0.0
        %653 = vmatprep.subr.mxu0 0.0
        %654 = vmatpush1.msra.mxu0 0.0
        %655 = vmatprep.subr.mxu0 0.0
        %656 = vmatpush1.msra.mxu0 0.0
        %657 = vmatprep.subr.mxu0 0.0
        %658 = vmatpush1.msra.mxu0 0.0
        %659 = vmatprep.subr.mxu0 0.0
        %660 = vmatpush1.msra.mxu0 0.0
        %661 = vmatprep.subr.mxu0 0.0
        %662 = vmatpush1.msra.mxu0 0.0
        %663 = vmatprep.subr.mxu0 0.0
        %664 = vmatpush1.msra.mxu0 0.0
        %665 = vmatprep.subr.mxu0 0.0
        %666 = vmatpush1.msra.mxu0 0.0
        %667 = vmatprep.subr.mxu0 0.0
        %668 = vmatpush1.msra.mxu0 0.0
        %669 = vmatprep.subr.mxu0 0.0
        %670 = vmatpush1.msra.mxu0 0.0
        %671 = vmatprep.subr.mxu0 0.0
        %672 = vmatpush1.msra.mxu0 0.0
        %673 = vmatprep.subr.mxu0 0.0
        %674 = vmatpush1.msra.mxu0 0.0
        %675 = vmatprep.mubr.f32.mxu0 0.0
        %676 = vmatmul.mubr.f32.gmra.mrb[0].mxu0 %v411
        %v677 = vpop.f32.mrb[0].mxu0
        %v678 = vadd.f32 0.0, %v677
        %v679 = vpop.f32.mrb[0].mxu0
        %680 = vmatprep.mubr.f32.mxu0 0.0
        %681 = vmatmul.mubr.f32.gmra.mrb[0].mxu0 %v414
        %v682 = vpop.f32.mrb[0].mxu0
        %v683 = vadd.f32 0.0, %v682
        %v684 = vpop.f32.mrb[0].mxu0
        %685 = vmatprep.mubr.f32.mxu0 0.0
        %686 = vmatmul.mubr.f32.gmra.mrb[0].mxu0 %v417
        %v687 = vpop.f32.mrb[0].mxu0
        %v688 = vadd.f32 0.0, %v687
        %v689 = vpop.f32.mrb[0].mxu0
        %690 = vmatprep.mubr.f32.mxu0 0.0
        %691 = vmatmul.mubr.f32.gmra.mrb[0].mxu0 %v420
        %v692 = vpop.f32.mrb[0].mxu0
        %v693 = vadd.f32 0.0, %v692
        %v694 = vpop.f32.mrb[0].mxu0
        %695 = vmatprep.mubr.f32.mxu0 0.0
        %696 = vmatmul.mubr.f32.gmra.mrb[0].mxu0 %v423
        %v697 = vpop.f32.mrb[0].mxu0
        %v698 = vadd.f32 0.0, %v697
        %v699 = vpop.f32.mrb[0].mxu0
        %700 = vmatprep.mubr.f32.mxu0 0.0
        %701 = vmatmul.mubr.f32.gmra.mrb[0].mxu0 %v426
        %v702 = vpop.f32.mrb[0].mxu0
        %v703 = vadd.f32 0.0, %v702
        %v704 = vpop.f32.mrb[0].mxu0
        %705 = vmatprep.mubr.f32.mxu0 0.0
        %706 = vmatmul.mubr.f32.gmra.mrb[0].mxu0 %v429
        %v707 = vpop.f32.mrb[0].mxu0
        %v708 = vadd.f32 0.0, %v707
        %v709 = vpop.f32.mrb[0].mxu0
        %710 = vmatprep.mubr.f32.mxu0 0.0
        %711 = vmatmul.mubr.f32.gmra.mrb[0].mxu0 %v432
        %v712 = vpop.f32.mrb[0].mxu0
        %v713 = vadd.f32 0.0, %v712
        %v714 = vpop.f32.mrb[0].mxu0
        %715 = vmatprep.mubr.f32.mxu0 0.0
        %716 = vmatmul.mubr.f32.gmra.mrb[0].mxu0 %v435
        %v717 = vpop.f32.mrb[0].mxu0
        %v718 = vadd.f32 0.0, %v717
        %v719 = vpop.f32.mrb[0].mxu0
        %720 = vmatprep.mubr.f32.mxu0 0.0
        %721 = vmatmul.mubr.f32.gmra.mrb[0].mxu0 %v438
        %v722 = vpop.f32.mrb[0].mxu0
        %v723 = vadd.f32 0.0, %v722
        %v724 = vpop.f32.mrb[0].mxu0
        %725 = vmatprep.mubr.f32.mxu0 0.0
        %726 = vmatmul.mubr.f32.gmra.mrb[0].mxu0 %v441
        %v727 = vpop.f32.mrb[0].mxu0
        %v728 = vadd.f32 0.0, %v727
        %v729 = vpop.f32.mrb[0].mxu0
        %730 = vmatprep.mubr.f32.mxu0 0.0
        %731 = vmatmul.mubr.f32.gmra.mrb[0].mxu0 %v444
        %v732 = vpop.f32.mrb[0].mxu0
        %v733 = vadd.f32 0.0, %v732
        %v734 = vpop.f32.mrb[0].mxu0
        %735 = vmatprep.mubr.f32.mxu0 0.0
        %736 = vmatmul.mubr.f32.gmra.mrb[0].mxu0 %v447
        %v737 = vpop.f32.mrb[0].mxu0
        %v738 = vadd.f32 0.0, %v737
        %v739 = vpop.f32.mrb[0].mxu0
        %740 = vmatprep.mubr.f32.mxu0 0.0
        %741 = vmatmul.mubr.f32.gmra.mrb[0].mxu0 %v450
        %v742 = vpop.f32.mrb[0].mxu0
        %v743 = vadd.f32 0.0, %v742
        %v744 = vpop.f32.mrb[0].mxu0
        %745 = vmatprep.mubr.f32.mxu0 0.0
        %746 = vmatmul.mubr.f32.gmra.mrb[0].mxu0 %v453
        %v747 = vpop.f32.mrb[0].mxu0
        %v748 = vadd.f32 0.0, %v747
        %v749 = vpop.f32.mrb[0].mxu0
        %750 = vmatprep.mubr.f32.mxu0 0.0
        %751 = vmatmul.mubr.f32.gmra.mrb[0].mxu0 %v456
        %v752 = vpop.f32.mrb[0].mxu0
        %v753 = vadd.f32 0.0, %v752
        %v754 = vpop.f32.mrb[0].mxu0
        %755 = vdwg.mxu0
        %v756 = vsub.f32 %v280, %v529
        %v757 = vsub.f32 %v281, %v534
        %v758 = vsub.f32 %v282, %v539
        %v759 = vsub.f32 %v283, %v544
        %v760 = vsub.f32 %v284, %v549
        %v761 = vsub.f32 %v285, %v554
        %v762 = vsub.f32 %v286, %v559
        %v763 = vsub.f32 %v287, %v564
        %v764 = vsub.f32 %v288, %v569
        %v765 = vsub.f32 %v289, %v574
        %v766 = vsub.f32 %v290, %v579
        %v767 = vsub.f32 %v291, %v584
        %v768 = vsub.f32 %v292, %v589
        %v769 = vsub.f32 %v293, %v594
        %v770 = vsub.f32 %v294, %v599
        %v771 = vsub.f32 %v295, %v604
        %v772 = vmul.f32 %v756, %v678
        %v773 = vmul.f32 %v757, %v683
        %v774 = vmul.f32 %v758, %v688
        %v775 = vmul.f32 %v759, %v693
        %v776 = vmul.f32 %v760, %v698
        %v777 = vmul.f32 %v761, %v703
        %v778 = vmul.f32 %v762, %v708
        %v779 = vmul.f32 %v763, %v713
        %v780 = vmul.f32 %v764, %v718
        %v781 = vmul.f32 %v765, %v723
        %v782 = vmul.f32 %v766, %v728
        %v783 = vmul.f32 %v767, %v733
        %v784 = vmul.f32 %v768, %v738
        %v785 = vmul.f32 %v769, %v743
        %v786 = vmul.f32 %v770, %v748
        %v787 = vmul.f32 %v771, %v753
        %v788 = vld [vmem:[%s4] sm:$0xff]
        %v789 = vld [vmem:[%s4 + $0x8] sm:$0xff]
        %v790 = vld [vmem:[%s4 + $0x10] sm:$0xff]
        %v791 = vld [vmem:[%s4 + $0x18] sm:$0xff]
        %v792 = vld [vmem:[%s279] sm:$0xff]
        %v793 = vld [vmem:[%s279 + $0x8] sm:$0xff]
        %v794 = vld [vmem:[%s279 + $0x10] sm:$0xff]
        %v795 = vld [vmem:[%s279 + $0x18] sm:$0xff]
        %797 = vset.pattern.permute.xlu0 0
        %798 = vperm.xlu0 %797, %v792
        %v799 = vpop.permute.xlu0 %798
        %802 = vset.pattern.permute.xlu0 0
        %803 = vperm.xlu0 %802, %v793
        %v804 = vpop.permute.xlu0 %803
        %807 = vset.pattern.permute.xlu0 0
        %808 = vperm.xlu0 %807, %v794
        %v809 = vpop.permute.xlu0 %808
        %812 = vset.pattern.permute.xlu0 0
        %813 = vperm.xlu0 %812, %v795
        %v814 = vpop.permute.xlu0 %813
        %816 = vmatprep.subr.mxu0 0.0
        %817 = vmatpush1.msra.mxu0 %v772
        %818 = vmatprep.subr.mxu0 0.0
        %819 = vmatpush1.msra.mxu0 %v773
        %820 = vmatprep.subr.mxu0 0.0
        %821 = vmatpush1.msra.mxu0 %v774
        %822 = vmatprep.subr.mxu0 0.0
        %823 = vmatpush1.msra.mxu0 %v775
        %824 = vmatprep.subr.mxu0 0.0
        %825 = vmatpush1.msra.mxu0 %v776
        %826 = vmatprep.subr.mxu0 0.0
        %827 = vmatpush1.msra.mxu0 %v777
        %828 = vmatprep.subr.mxu0 0.0
        %829 = vmatpush1.msra.mxu0 %v778
        %830 = vmatprep.subr.mxu0 0.0
        %831 = vmatpush1.msra.mxu0 %v779
        %832 = vmatprep.subr.mxu0 0.0
        %833 = vmatpush1.msra.mxu0 %v780
        %834 = vmatprep.subr.mxu0 0.0
        %835 = vmatpush1.msra.mxu0 %v781
        %836 = vmatprep.subr.mxu0 0.0
        %837 = vmatpush1.msra.mxu0 %v782
        %838 = vmatprep.subr.mxu0 0.0
        %839 = vmatpush1.msra.mxu0 %v783
        %840 = vmatprep.subr.mxu0 0.0
        %841 = vmatpush1.msra.mxu0 %v784
        %842 = vmatprep.subr.mxu0 0.0
        %843 = vmatpush1.msra.mxu0 %v785
        %844 = vmatprep.subr.mxu0 0.0
        %845 = vmatpush1.msra.mxu0 %v786
        %846 = vmatprep.subr.mxu0 0.0
        %847 = vmatpush1.msra.mxu0 %v787
        %848 = vmatprep.subr.mxu0 0.0
        %849 = vmatpush1.msra.mxu0 0.0
        %850 = vmatprep.subr.mxu0 0.0
        %851 = vmatpush1.msra.mxu0 0.0
        %852 = vmatprep.subr.mxu0 0.0
        %853 = vmatpush1.msra.mxu0 0.0
        %854 = vmatprep.subr.mxu0 0.0
        %855 = vmatpush1.msra.mxu0 0.0
        %856 = vmatprep.subr.mxu0 0.0
        %857 = vmatpush1.msra.mxu0 0.0
        %858 = vmatprep.subr.mxu0 0.0
        %859 = vmatpush1.msra.mxu0 0.0
        %860 = vmatprep.subr.mxu0 0.0
        %861 = vmatpush1.msra.mxu0 0.0
        %862 = vmatprep.subr.mxu0 0.0
        %863 = vmatpush1.msra.mxu0 0.0
        %864 = vmatprep.subr.mxu0 0.0
        %865 = vmatpush1.msra.mxu0 0.0
        %866 = vmatprep.subr.mxu0 0.0
        %867 = vmatpush1.msra.mxu0 0.0
        %868 = vmatprep.subr.mxu0 0.0
        %869 = vmatpush1.msra.mxu0 0.0
        %870 = vmatprep.subr.mxu0 0.0
        %871 = vmatpush1.msra.mxu0 0.0
        %872 = vmatprep.subr.mxu0 0.0
        %873 = vmatpush1.msra.mxu0 0.0
        %874 = vmatprep.subr.mxu0 0.0
        %875 = vmatpush1.msra.mxu0 0.0
        %876 = vmatprep.subr.mxu0 0.0
        %877 = vmatpush1.msra.mxu0 0.0
        %878 = vmatprep.subr.mxu0 0.0
        %879 = vmatpush1.msra.mxu0 0.0
        %880 = vmatprep.mubr.f32.mxu0 0.0
        %881 = vmatmul.mubr.f32.gmra.mrb[0].mxu0 %v788
        %v882 = vpop.f32.mrb[0].mxu0
        %v883 = vadd.f32 %v799, %v882
        %v884 = vpop.f32.mrb[0].mxu0
        %885 = vmatprep.mubr.f32.mxu0 0.0
        %886 = vmatmul.mubr.f32.gmra.mrb[0].mxu0 %v789
        %v887 = vpop.f32.mrb[0].mxu0
        %v888 = vadd.f32 %v804, %v887
        %v889 = vpop.f32.mrb[0].mxu0
        %890 = vmatprep.mubr.f32.mxu0 0.0
        %891 = vmatmul.mubr.f32.gmra.mrb[0].mxu0 %v790
        %v892 = vpop.f32.mrb[0].mxu0
        %v893 = vadd.f32 %v809, %v892
        %v894 = vpop.f32.mrb[0].mxu0
        %895 = vmatprep.mubr.f32.mxu0 0.0
        %896 = vmatmul.mubr.f32.gmra.mrb[0].mxu0 %v791
        %v897 = vpop.f32.mrb[0].mxu0
        %v898 = vadd.f32 %v814, %v897
        %v899 = vpop.f32.mrb[0].mxu0
        %900 = vdwg.mxu0
        %v901 = vrot.slane %v883, 4
        %v902 = vmax.f32 %v883, %v901
        %v903 = vrot.slane %v902, 2
        %v904 = vmax.f32 %v902, %v903
        %v905 = vrot.slane %v904, 1
        %v906 = vmax.f32 %v904, %v905
        %v907 = vrot.slane %v888, 4
        %v908 = vmax.f32 %v888, %v907
        %v909 = vrot.slane %v908, 2
        %v910 = vmax.f32 %v908, %v909
        %v911 = vrot.slane %v910, 1
        %v912 = vmax.f32 %v910, %v911
        %v913 = vrot.slane %v893, 4
        %v914 = vmax.f32 %v893, %v913
        %v915 = vrot.slane %v914, 2
        %v916 = vmax.f32 %v914, %v915
        %v917 = vrot.slane %v916, 1
        %v918 = vmax.f32 %v916, %v917
        %v919 = vrot.slane %v898, 4
        %v920 = vmax.f32 %v898, %v919
        %v921 = vrot.slane %v920, 2
        %v922 = vmax.f32 %v920, %v921
        %v923 = vrot.slane %v922, 1
        %v924 = vmax.f32 %v922, %v923
        %v925 = vsub.f32 %v883, %v906
        %v926 = vsub.f32 %v888, %v912
        %v927 = vsub.f32 %v893, %v918
        %v928 = vsub.f32 %v898, %v924
        %v929 = vmul.f32 %v925, 1.442695
        %v930 = vpow.pop %v929
        %v931 = vmul.f32 %v926, 1.442695
        %v932 = vpow.pop %v931
        %v933 = vmul.f32 %v927, 1.442695
        %v934 = vpow.pop %v933
        %v935 = vmul.f32 %v928, 1.442695
        %v936 = vpow.pop %v935
        %v937 = vrot.slane %v930, 4
        %v938 = vadd.f32 %v930, %v937
        %v939 = vrot.slane %v938, 2
        %v940 = vadd.f32 %v938, %v939
        %v941 = vrot.slane %v940, 1
        %v942 = vadd.f32 %v940, %v941
        %v943 = vrot.slane %v932, 4
        %v944 = vadd.f32 %v932, %v943
        %v945 = vrot.slane %v944, 2
        %v946 = vadd.f32 %v944, %v945
        %v947 = vrot.slane %v946, 1
        %v948 = vadd.f32 %v946, %v947
        %v949 = vrot.slane %v934, 4
        %v950 = vadd.f32 %v934, %v949
        %v951 = vrot.slane %v950, 2
        %v952 = vadd.f32 %v950, %v951
        %v953 = vrot.slane %v952, 1
        %v954 = vadd.f32 %v952, %v953
        %v955 = vrot.slane %v936, 4
        %v956 = vadd.f32 %v936, %v955
        %v957 = vrot.slane %v956, 2
        %v958 = vadd.f32 %v956, %v957
        %v959 = vrot.slane %v958, 1
        %v960 = vadd.f32 %v958, %v959
        %v961 = vrcp.pop %v942
        %v962 = vmul.f32 %v930, %v961
        %v963 = vrcp.pop %v948
        %v964 = vmul.f32 %v932, %v963
        %v965 = vrcp.pop %v954
        %v966 = vmul.f32 %v934, %v965
        %v967 = vrcp.pop %v960
        %v968 = vmul.f32 %v936, %v967
        %969 = vst [vmem:[%s274] sm:$0xff] %v962
        %970 = vst [vmem:[%s274 + $0x8] sm:$0xff] %v964
        %971 = vst [vmem:[%s274 + $0x10] sm:$0xff] %v966
        %972 = vst [vmem:[%s274 + $0x18] sm:$0xff] %v968
        %s973 = sand.u32 %s161, 1
        %s974 = scalar_lea.sflag [#allocation4], %s973
        %s975 = sand.u32 %s161, 1
        %s976 = smul.addr %s975, 32
        %s977 = scalar_lea.vmem [#allocation5], %s976
        // Predicated region
        $region45: #{tpu_custom_call.1} parent=39 // pred_check
          %p978 = pneg %p171
        $region46: #{tpu_custom_call.1} parent=39 // pred_check_branch
          %980 = sbr.rel (%p978) target = $region48
        $region47: #{tpu_custom_call.1} parent=39 // pred_region
          %s982 = ssub.s32 512, 512
          %983 = vsyncadd %s974, %s982
          %s984 = smul.addr %s26, 8
          %s985 = sadd.s32 %s27, %s984
          %s986 = smul.addr %s985, 128
          %s987 = scalar_lea.hbm %s5, %s986
          %s988 = sshll.u32 %s977, 4
          %s989 = int_to_ptr.vmem [resolvable:$true] %s988
          %994 = dma.vmem_to_hbm [thread:$0]  %s989, 512, %s987, %s974, 128, 256, 8
        $region48: #{tpu_custom_call.1} parent=39 // pred_fallthru
          _
      $region40: #{tpu_custom_call.1} parent=5 // pred_fallthru
        _
      %p995 = scmp.le.s32.totalorder 2, %s17
      // Predicated region
      $region49: #{tpu_custom_call.1} parent=5 // pred_check
        %p996 = pneg %p995
      $region50: #{tpu_custom_call.1} parent=5 // pred_check_branch
        %998 = sbr.rel (%p996) target = $region52
      $region51: #{tpu_custom_call.1} parent=5 // pred_region
        %s999 = ssub.s32 %s17, 2
        // Predicated region
        $region53: #{tpu_custom_call.1} parent=51 // pred_check
          %p1000 = pneg %p177
        $region54: #{tpu_custom_call.1} parent=51 // pred_check_branch
          %1002 = sbr.rel (%p1000) target = $region56
        $region55: #{tpu_custom_call.1} parent=51 // pred_region
          %s1003 = sand.u32 %s162, 1
          %s1004 = scalar_lea.sflag [#allocation4], %s1003
          %s1005 = sand.u32 %s162, 1
          %s1006 = smul.addr %s1005, 32
          %s1007 = scalar_lea.vmem [#allocation5], %s1006
          %1008 = dma.done %s1004, 512
        $region56: #{tpu_custom_call.1} parent=51 // pred_fallthru
          _
      $region52: #{tpu_custom_call.1} parent=5 // pred_fallthru
        _
    $region6: #{tpu_custom_call.1} parent=1 // loop_footer
      %s21 = sadd.s32 1, %s17
    $region7: #{tpu_custom_call.1} parent=1 // loop_footer_branch
      %16 = sbr.rel target = $region3
    $region8: #{tpu_custom_call.1} parent=1 // loop_exit
      _
    %1009 = vsyncpa [#allocation3], 1
    %s1010 = scalar_lea.sflag [#allocation3], 1
    %1011 = vsyncpa %s1010, 1
    %1012 = vsyncpa [#allocation4], 1
    %s1013 = scalar_lea.sflag [#allocation4], 1
    %1014 = vsyncpa %s1013, 1

</llo_original>
